<compile_context>
chip_gen: v7x
topology: tpu7x:2x2x1
jax: 0.10.0
libtpu: 0.0.40
codegen_flags: <defaults>
</compile_context>

<pallas_src>
import jax
import jax.numpy as jnp
import numpy as np
from jax.experimental import pallas as pl
from jax.experimental.pallas import tpu as pltpu


def _round_up(x, m):
    return (x + m - 1) // m * m


def mean_agg_kernel(mask_ref, dw_ref, fw_ref, emb_ref, out_ref, acc_ref, cnt_ref):
    """grid = (row tiles, U tiles).  Accumulate the weighted matmul and the
    per-row neighbor count over the U (reduction) axis; normalize + tanh on
    the last U tile only (P3 accumulator pattern)."""
    k = pl.program_id(1)

    @pl.when(k == 0)
    def _init():
        acc_ref[...] = jnp.zeros_like(acc_ref)
        cnt_ref[...] = jnp.zeros_like(cnt_ref)

    # Inputs are stored narrow (int8 mask, bf16 weights); compute in f32
    # (v5e has no bf16 VPU, and this matches the torch float pipeline).
    mask = mask_ref[...].astype(jnp.float32)                 # (tm, tk) 0/1
    w = mask * dw_ref[...].astype(jnp.float32) * fw_ref[...].astype(jnp.float32)

    # Neighbor count is exact (sum of 0/1), so no trunc needed.
    cnt_ref[...] += jnp.sum(mask, axis=1, keepdims=True)     # (tm, 1)
    # 1/num_neigh is a per-row scalar -> factor it out of the matmul and apply
    # once at the end instead of dividing a whole (tm, tk) tile per step.
    acc_ref[...] += jnp.dot(w, emb_ref[...].astype(jnp.float32),
                            preferred_element_type=jnp.float32)

    @pl.when(k == pl.num_programs(1) - 1)
    def _finalize():
        inv = 1.0 / cnt_ref[...]          # exact division (not approx recip)
        out_ref[...] = jnp.tanh(acc_ref[...] * inv).astype(out_ref.dtype)


def mean_aggregator_forward(mask, d_weight, f_weight, embed, *, tm=256, tk=512):
    """mask: (N, U) 0/1 (any int/float dtype); d_weight/f_weight: (N, U)
    (f32 or bf16); embed: (U, D).  Returns (N, D) float32 = tanh of the
    weighted-mean aggregation, matching MeanAggregator1.forward."""
    N, U = mask.shape
    U2, D = embed.shape
    assert U == U2

    # --- layout / tiling ----------------------------------------------------
    # Row tile: keep it a multiple of 32 (safe sublane count for int8/bf16/f32
    # tiles) and no larger than the padded row count.
    tm = min(tm, _round_up(N, 32))
    # Lane-dense U and D (multiples of 128); tile U only when it is large.
    U_128 = _round_up(U, 128)
    if U_128 <= tk:
        tk, U_pad = U_128, U_128
    else:
        U_pad = _round_up(U, tk)
    D_pad = _round_up(D, 128)
    N_pad = _round_up(N, tm)

    mask_p = jnp.pad(mask, ((0, N_pad - N), (0, U_pad - U)))
    if N_pad > N:
        # Give padded rows one fake neighbor so 1/num_neigh stays finite
        # (their outputs are sliced off below anyway).
        mask_p = mask_p.at[N:, 0].set(1)
    dw_p = jnp.pad(d_weight, ((0, N_pad - N), (0, U_pad - U)), constant_values=1)
    fw_p = jnp.pad(f_weight, ((0, N_pad - N), (0, U_pad - U)), constant_values=1)
    emb_p = jnp.pad(embed, ((0, U_pad - U), (0, D_pad - D)))

    n_row = N_pad // tm
    n_k = U_pad // tk

    # --- VMEM budget: double-buffered in/embed/out tiles + scratch + slack ---
    bytes_in = 2 * tm * tk * (mask_p.dtype.itemsize
                              + dw_p.dtype.itemsize + fw_p.dtype.itemsize)
    bytes_emb = 2 * tk * D_pad * emb_p.dtype.itemsize
    bytes_out = 2 * tm * D_pad * 4
    bytes_scr = tm * D_pad * 4 + tm * 128 * 4
    vmem_limit = min(int(bytes_in + bytes_emb + bytes_out + bytes_scr) + (4 << 20),
                     100 * 1024 * 1024)

    out = pl.pallas_call(
        mean_agg_kernel,
        out_shape=jax.ShapeDtypeStruct((N_pad, D_pad), jnp.float32),
        grid_spec=pltpu.PrefetchScalarGridSpec(
            num_scalar_prefetch=0,
            grid=(n_row, n_k),
            in_specs=[
                pl.BlockSpec((tm, tk), lambda i, k: (i, k)),     # mask rows
                pl.BlockSpec((tm, tk), lambda i, k: (i, k)),     # d_weight rows
                pl.BlockSpec((tm, tk), lambda i, k: (i, k)),     # f_weight rows
                pl.BlockSpec((tk, D_pad), lambda i, k: (k, 0)),  # embed k-slab
            ],
            out_specs=pl.BlockSpec((tm, D_pad), lambda i, k: (i, 0)),
            scratch_shapes=[
                pltpu.VMEM((tm, D_pad), jnp.float32),   # matmul accumulator
                pltpu.VMEM((tm, 1), jnp.float32),       # per-row neighbor count
            ],
        ),
        compiler_params=pltpu.CompilerParams(
            dimension_semantics=("parallel", "arbitrary"),
            vmem_limit_bytes=vmem_limit,
        ),
    )(mask_p, dw_p, fw_p, emb_p)
    return out[:N, :D]


def build_inputs(key, n_nodes=16, n_unique=64, feat_dim=32, num_sample=10):
    """Deterministic stand-in for the host-side graph bookkeeping of the module.

    # TODO(synk): random.sample-based neighbor sampling and the set/dict
    # unique-node remapping are host-side python with no Pallas equivalent;
    # we synthesize an equivalent 0/1 mask + weight matrices directly.
    """
    k1, k2, k3, k4 = jax.random.split(key, 4)
    # 0/1 adjacency: each node connects to ~num_sample unique neighbors.
    probs = jax.random.uniform(k1, (n_nodes, n_unique))
    mask = (probs < (num_sample / n_unique)).astype(jnp.float32)
    # Guarantee every row has at least one neighbor (module assumes non-empty).
    first_col = jnp.zeros((n_nodes, n_unique), jnp.float32).at[:, 0].set(1.0)
    mask = jnp.maximum(mask, first_col)
    # d_weight = 1 / (1 + exp(ww)) with ww < 0 -> values in (0.5, 1).
    d_weight = 1.0 / (1.0 + jnp.exp(-jnp.abs(jax.random.normal(k2, (n_nodes, n_unique)))))
    # f_weight defaults to 1, with fractional similarity offsets on some entries.
    f_weight = jnp.where(jax.random.uniform(k3, (n_nodes, n_unique)) < 0.2,
                         jax.random.uniform(k3, (n_nodes, n_unique)), 1.0)
    # embed_matrix = self.features(unique_nodes_list, ...) -> synthetic features.
    embed = jax.random.normal(k4, (n_unique, feat_dim), dtype=jnp.float32)
    # Narrow storage dtypes (mask is exactly 0/1, so int8 is lossless; the
    # weights are stored bf16 and are the values the forward actually uses).
    return (mask.astype(jnp.int8), d_weight.astype(jnp.bfloat16),
            f_weight.astype(jnp.bfloat16), embed)


def reference(mask, d_weight, f_weight, embed):
    """Faithful (torch-ordered) f32 reference on the same input values."""
    mask = mask.astype(jnp.float32)
    dw = d_weight.astype(jnp.float32)
    fw = f_weight.astype(jnp.float32)
    num_neigh = jnp.sum(mask, axis=1, keepdims=True)   # exact integer counts
    w = (mask / num_neigh) * dw * fw
    return jnp.tanh(w @ embed.astype(jnp.float32))


if __name__ == "__main__":
    key = jax.random.PRNGKey(0)
    mask, d_weight, f_weight, embed = build_inputs(key)

    out = mean_aggregator_forward(mask, d_weight, f_weight, embed)
    out = jax.block_until_ready(out)

    ref = reference(mask, d_weight, f_weight, embed)
    np.testing.assert_allclose(np.asarray(out), np.asarray(ref),
                               rtol=1e-5, atol=1e-5)
    print("KERNEL_OK")
</pallas_src>

<mosaic_0001>
module attributes {stable_mosaic.version = 11 : i64} {
  func.func @mean_agg_kernel(%arg0: i32, %arg1: i32, %arg2: memref<32x128xi8, #tpu.memory_space<vmem>>, %arg3: memref<32x128xbf16, #tpu.memory_space<vmem>>, %arg4: memref<32x128xbf16, #tpu.memory_space<vmem>>, %arg5: memref<128x128xf32, #tpu.memory_space<vmem>>, %arg6: memref<32x128xf32, #tpu.memory_space<vmem>>, %arg7: memref<32x128xf32, #tpu.memory_space<vmem>>, %arg8: memref<32x1xf32, #tpu.memory_space<vmem>>) attributes {dimension_semantics = [#tpu.dimension_semantics<parallel>, #tpu.dimension_semantics<arbitrary>], iteration_bounds = array<i64: 1, 1>, scalar_prefetch = 0 : i64, scratch_operands = 2 : i64, tpu.core_type = #tpu.core_type<tc>, window_params = [{transform_indices = @transform_0, window_bounds = array<i64: 32, 128>}, {transform_indices = @transform_1, window_bounds = array<i64: 32, 128>}, {transform_indices = @transform_2, window_bounds = array<i64: 32, 128>}, {transform_indices = @transform_3, window_bounds = array<i64: 128, 128>}, {transform_indices = @transform_4, window_bounds = array<i64: 32, 128>}]} {
    %c0_i32 = arith.constant 0 : i32
    %0 = arith.cmpi eq, %arg1, %c0_i32 : i32
    %1 = arith.extui %0 : i1 to i32
    %c0_i32_0 = arith.constant 0 : i32
    %2 = arith.cmpi ne, %1, %c0_i32_0 : i32
    scf.if %2 {
      %cst_19 = arith.constant 0.000000e+00 : f32
      %24 = vector.broadcast %cst_19 : f32 to vector<32x128xf32>
      %c0_20 = arith.constant 0 : index
      %c0_21 = arith.constant 0 : index
      %25 = vector.load %arg7[%c0_20, %c0_21] : memref<32x128xf32, #tpu.memory_space<vmem>>, vector<32x128xf32>
      tpu.vector_store %arg7[%c0_20, %c0_21], %24 {strides = array<i32>} : memref<32x128xf32, #tpu.memory_space<vmem>>, vector<32x128xf32>,
      %cst_22 = arith.constant 0.000000e+00 : f32
      %26 = vector.broadcast %cst_22 : f32 to vector<32x1xf32>
      %c0_23 = arith.constant 0 : index
      %c0_24 = arith.constant 0 : index
      %27 = vector.load %arg8[%c0_23, %c0_24] : memref<32x1xf32, #tpu.memory_space<vmem>>, vector<32x1xf32>
      tpu.vector_store %arg8[%c0_23, %c0_24], %26 {strides = array<i32>} : memref<32x1xf32, #tpu.memory_space<vmem>>, vector<32x1xf32>,
    } else {
    }
    %c0 = arith.constant 0 : index
    %c0_1 = arith.constant 0 : index
    %3 = vector.load %arg2[%c0, %c0_1] : memref<32x128xi8, #tpu.memory_space<vmem>>, vector<32x128xi8>
    %4 = arith.sitofp %3 : vector<32x128xi8> to vector<32x128xf32>
    %c0_2 = arith.constant 0 : index
    %c0_3 = arith.constant 0 : index
    %5 = vector.load %arg3[%c0_2, %c0_3] : memref<32x128xbf16, #tpu.memory_space<vmem>>, vector<32x128xbf16>
    %6 = arith.extf %5 : vector<32x128xbf16> to vector<32x128xf32>
    %7 = arith.mulf %4, %6 : vector<32x128xf32>
    %c0_4 = arith.constant 0 : index
    %c0_5 = arith.constant 0 : index
    %8 = vector.load %arg4[%c0_4, %c0_5] : memref<32x128xbf16, #tpu.memory_space<vmem>>, vector<32x128xbf16>
    %9 = arith.extf %8 : vector<32x128xbf16> to vector<32x128xf32>
    %10 = arith.mulf %7, %9 : vector<32x128xf32>
    %c0_6 = arith.constant 0 : index
    %c0_7 = arith.constant 0 : index
    %11 = vector.load %arg8[%c0_6, %c0_7] : memref<32x1xf32, #tpu.memory_space<vmem>>, vector<32x1xf32>
    %cst = arith.constant dense<0.000000e+00> : vector<32xf32>
    %12 = vector.multi_reduction <add>, %4, %cst [1] : vector<32x128xf32> to vector<32xf32>
    %13 = vector.shape_cast %12 : vector<32xf32> to vector<32x1xf32>
    %14 = arith.addf %11, %13 : vector<32x1xf32>
    %c0_8 = arith.constant 0 : index
    %c0_9 = arith.constant 0 : index
    %15 = vector.load %arg8[%c0_8, %c0_9] : memref<32x1xf32, #tpu.memory_space<vmem>>, vector<32x1xf32>
    tpu.vector_store %arg8[%c0_8, %c0_9], %14 {strides = array<i32>} : memref<32x1xf32, #tpu.memory_space<vmem>>, vector<32x1xf32>,
    %c0_10 = arith.constant 0 : index
    %c0_11 = arith.constant 0 : index
    %16 = vector.load %arg7[%c0_10, %c0_11] : memref<32x128xf32, #tpu.memory_space<vmem>>, vector<32x128xf32>
    %c0_12 = arith.constant 0 : index
    %c0_13 = arith.constant 0 : index
    %17 = vector.load %arg5[%c0_12, %c0_13] : memref<128x128xf32, #tpu.memory_space<vmem>>, vector<128x128xf32>
    %cst_14 = arith.constant dense<0.000000e+00> : vector<32x128xf32>
    %18 = tpu.matmul %10, %17, %cst_14 {dimension_numbers = #tpu.dot_dimension_numbers<[1], [0], [0], [1], [0, 0, 1, 1], [], []>} : vector<32x128xf32>, vector<128x128xf32>, vector<32x128xf32> -> vector<32x128xf32>
    %19 = arith.addf %16, %18 : vector<32x128xf32>
    %c0_15 = arith.constant 0 : index
    %c0_16 = arith.constant 0 : index
    %20 = vector.load %arg7[%c0_15, %c0_16] : memref<32x128xf32, #tpu.memory_space<vmem>>, vector<32x128xf32>
    tpu.vector_store %arg7[%c0_15, %c0_16], %19 {strides = array<i32>} : memref<32x128xf32, #tpu.memory_space<vmem>>, vector<32x128xf32>,
    %c0_i32_17 = arith.constant 0 : i32
    %21 = arith.cmpi eq, %arg1, %c0_i32_17 : i32
    %22 = arith.extui %21 : i1 to i32
    %c0_i32_18 = arith.constant 0 : i32
    %23 = arith.cmpi ne, %22, %c0_i32_18 : i32
    scf.if %23 {
      %c0_19 = arith.constant 0 : index
      %c0_20 = arith.constant 0 : index
      %24 = vector.load %arg8[%c0_19, %c0_20] : memref<32x1xf32, #tpu.memory_space<vmem>>, vector<32x1xf32>
      %cst_21 = arith.constant 1.000000e+00 : f32
      %25 = vector.broadcast %cst_21 : f32 to vector<32x1xf32>
      %26 = arith.divf %25, %24 : vector<32x1xf32>
      %c0_22 = arith.constant 0 : index
      %c0_23 = arith.constant 0 : index
      %27 = vector.load %arg7[%c0_22, %c0_23] : memref<32x128xf32, #tpu.memory_space<vmem>>, vector<32x128xf32>
      %28 = vector.broadcast %26 : vector<32x1xf32> to vector<32x128xf32>
      %29 = arith.mulf %27, %28 : vector<32x128xf32>
      %30 = math.tanh %29 : vector<32x128xf32>
      %c0_24 = arith.constant 0 : index
      %c0_25 = arith.constant 0 : index
      %31 = vector.load %arg6[%c0_24, %c0_25] : memref<32x128xf32, #tpu.memory_space<vmem>>, vector<32x128xf32>
      tpu.vector_store %arg6[%c0_24, %c0_25], %30 {strides = array<i32>} : memref<32x128xf32, #tpu.memory_space<vmem>>, vector<32x128xf32>,
    } else {
    }
    return
  }
  func.func @transform_0(%arg0: i32, %arg1: i32) -> (i32, i32) {
    %c0_i32 = arith.constant 0 : i32
    return %arg0, %arg1 : i32, i32
  }
  func.func @transform_1(%arg0: i32, %arg1: i32) -> (i32, i32) {
    %c0_i32 = arith.constant 0 : i32
    return %arg0, %arg1 : i32, i32
  }
  func.func @transform_2(%arg0: i32, %arg1: i32) -> (i32, i32) {
    %c0_i32 = arith.constant 0 : i32
    return %arg0, %arg1 : i32, i32
  }
  func.func @transform_3(%arg0: i32, %arg1: i32) -> (i32, i32) {
    %c0_i32 = arith.constant 0 : i32
    %c0_i32_0 = arith.constant 0 : i32
    return %arg1, %c0_i32 : i32, i32
  }
  func.func @transform_4(%arg0: i32, %arg1: i32) -> (i32, i32) {
    %c0_i32 = arith.constant 0 : i32
    %c0_i32_0 = arith.constant 0 : i32
    return %arg0, %c0_i32 : i32, i32
  }
}

</mosaic_0001>

<llo_original>
// kernel: tpu_custom_call.1
$region0: #{tpu_custom_call.1}
  #allocation0 [shape = 'u32[]', space=smem, size = 0x4, offset = 0x4, fixed_abs, tag = 'smem constant byte address 0x4 - core index']
  #allocation1 [shape = 'u32[144,128]{1,0:T(1,128)}', space=vmem, size = 0x12000, scoped, tag = 'internal scratch']
  #allocation2 [shape = 'f32[32,128]{1,0:T(8,128)}', space=vmem, size = 0x4000, scoped, tag = 'scratch operand']
  #allocation3 [shape = 'f32[32,1]{1,0:T(8,128)}', space=vmem, size = 0x4000, scoped, tag = 'scratch operand']
  %s0 = inlined_call_operand.hbm [shape: s8[32,128], index: 0, kind: input, shape index: {}]
  %s1 = inlined_call_operand.hbm [shape: bf16[32,128], index: 1, kind: input, shape index: {}]
  %s2 = inlined_call_operand.hbm [shape: bf16[32,128], index: 2, kind: input, shape index: {}]
  %s3 = inlined_call_operand.hbm [shape: f32[128,128], index: 3, kind: input, shape index: {}]
  %s4 = inlined_call_operand.hbm [shape: f32[32,128], index: 4, kind: output, shape index: {}]
  %s5 = sld [smem:[#allocation0]]
  $region50: #{tpu_custom_call.1} parent=0
    _
  %s7 = ssub.s32 1, %s5
  %s8 = scalar_select 0, %s7, %s5
  $region1: #{tpu_custom_call.1} parent=0
    #allocation4 [shape = 'u8[4096]{0}', space=vmem, size = 0x1000, scoped, tag = 'input window, operand 0, single buffered']
    #allocation5 [shape = 's32[1]{0}', space=sflag, size = 0x4, scoped, tag = 'scoped memory for tpu_custom_call.1']
    #allocation6 [shape = 's32[1]{0}', space=sflag, size = 0x4, scoped, tag = 'scoped memory for tpu_custom_call.1']
    #allocation7 [shape = 'u8[8192]{0}', space=vmem, size = 0x2000, scoped, tag = 'input window, operand 1, single buffered']
    #allocation8 [shape = 's32[1]{0}', space=sflag, size = 0x4, scoped, tag = 'scoped memory for tpu_custom_call.1']
    #allocation9 [shape = 'u8[8192]{0}', space=vmem, size = 0x2000, scoped, tag = 'input window, operand 2, single buffered']
    #allocation10 [shape = 'u8[65536]{0}', space=vmem, size = 0x10000, scoped, tag = 'input window, operand 3, single buffered']
    #allocation11 [shape = 's32[1]{0}', space=sflag, size = 0x4, scoped, tag = 'scoped memory for tpu_custom_call.1']
    #allocation12 [shape = 'u8[16384]{0}', space=vmem, size = 0x4000, scoped, tag = 'output window, operand 0, single buffered']
    %9 = vsyncpa [#allocation5], 0
    %10 = vsyncpa [#allocation8], 0
    %11 = vsyncpa [#allocation11], 0
    %12 = vsyncpa [#allocation6], 0
    // Predicated region
    $region2: #{tpu_custom_call.1} parent=1 // pred_check
      _
    $region3: #{tpu_custom_call.1} parent=1 // pred_check_branch
      %14 = sbr.rel (0) target = $region5
    $region4: #{tpu_custom_call.1} parent=1 // pred_region
      %s16 = ssub.s32 128, 128
      %17 = vsyncadd [#allocation5], %s16
      %s19 = sshll.u32 [#allocation4], 4
      %s20 = int_to_ptr.vmem [resolvable:$true] %s19
      %22 = dma.hbm_to_vmem [thread:$0]  %s0, 128, %s20, [#allocation5]
    $region5: #{tpu_custom_call.1} parent=1 // pred_fallthru
      _
    // Predicated region
    $region6: #{tpu_custom_call.1} parent=1 // pred_check
      _
    $region7: #{tpu_custom_call.1} parent=1 // pred_check_branch
      %24 = sbr.rel (0) target = $region9
    $region8: #{tpu_custom_call.1} parent=1 // pred_region
      %s26 = ssub.s32 256, 256
      %27 = vsyncadd [#allocation8], %s26
      %s28 = sshll.u32 [#allocation7], 4
      %s29 = int_to_ptr.vmem [resolvable:$true] %s28
      %34 = dma.hbm_to_vmem [thread:$0]  %s1, 256, %s29, [#allocation8], 64, 64, 4
    $region9: #{tpu_custom_call.1} parent=1 // pred_fallthru
      _
    // Predicated region
    $region10: #{tpu_custom_call.1} parent=1 // pred_check
      _
    $region11: #{tpu_custom_call.1} parent=1 // pred_check_branch
      %36 = sbr.rel (0) target = $region13
    $region12: #{tpu_custom_call.1} parent=1 // pred_region
      %s38 = ssub.s32 256, 256
      %39 = vsyncadd [#allocation8], %s38
      %s40 = sshll.u32 [#allocation9], 4
      %s41 = int_to_ptr.vmem [resolvable:$true] %s40
      %46 = dma.hbm_to_vmem [thread:$0]  %s2, 256, %s41, [#allocation8], 64, 64, 4
    $region13: #{tpu_custom_call.1} parent=1 // pred_fallthru
      _
    // Predicated region
    $region14: #{tpu_custom_call.1} parent=1 // pred_check
      _
    $region15: #{tpu_custom_call.1} parent=1 // pred_check_branch
      %48 = sbr.rel (0) target = $region17
    $region16: #{tpu_custom_call.1} parent=1 // pred_region
      %s50 = ssub.s32 2048, 2048
      %51 = vsyncadd [#allocation11], %s50
      %s52 = sshll.u32 [#allocation10], 4
      %s53 = int_to_ptr.vmem [resolvable:$true] %s52
      %58 = dma.hbm_to_vmem [thread:$0]  %s3, 2048, %s53, [#allocation11], 128, 128, 8
    $region17: #{tpu_custom_call.1} parent=1 // pred_fallthru
      _
    // Predicated region
    $region18: #{tpu_custom_call.1} parent=1 // pred_check
      _
    $region19: #{tpu_custom_call.1} parent=1 // pred_check_branch
      %60 = sbr.rel (0) target = $region21
    $region20: #{tpu_custom_call.1} parent=1 // pred_region
      %61 = dma.done [#allocation5], 128
    $region21: #{tpu_custom_call.1} parent=1 // pred_fallthru
      _
    // Predicated region
    $region22: #{tpu_custom_call.1} parent=1 // pred_check
      _
    $region23: #{tpu_custom_call.1} parent=1 // pred_check_branch
      %63 = sbr.rel (0) target = $region25
    $region24: #{tpu_custom_call.1} parent=1 // pred_region
      %64 = dma.done [#allocation8], 256
    $region25: #{tpu_custom_call.1} parent=1 // pred_fallthru
      _
    // Predicated region
    $region26: #{tpu_custom_call.1} parent=1 // pred_check
      _
    $region27: #{tpu_custom_call.1} parent=1 // pred_check_branch
      %66 = sbr.rel (0) target = $region29
    $region28: #{tpu_custom_call.1} parent=1 // pred_region
      %67 = dma.done [#allocation8], 256
    $region29: #{tpu_custom_call.1} parent=1 // pred_fallthru
      _
    // Predicated region
    $region30: #{tpu_custom_call.1} parent=1 // pred_check
      _
    $region31: #{tpu_custom_call.1} parent=1 // pred_check_branch
      %69 = sbr.rel (0) target = $region33
    $region32: #{tpu_custom_call.1} parent=1 // pred_region
      %70 = dma.done [#allocation11], 2048
    $region33: #{tpu_custom_call.1} parent=1 // pred_fallthru
      _
    %p71 = scmp.eq.s32.totalorder 0, 0
    // Predicated region
    $region34: #{tpu_custom_call.1} parent=1 // pred_check
      %p72 = pneg %p71
    $region35: #{tpu_custom_call.1} parent=1 // pred_check_branch
      %74 = sbr.rel (%p72) target = $region37
    $region36: #{tpu_custom_call.1} parent=1 // pred_region
      %75 = vst [vmem:[#allocation2] sm:$0xff] 0.0
      %76 = vst [vmem:[#allocation2 + $0x8] sm:$0xff] 0.0
      %77 = vst [vmem:[#allocation2 + $0x10] sm:$0xff] 0.0
      %78 = vst [vmem:[#allocation2 + $0x18] sm:$0xff] 0.0
      %vm79 = vcmask 7168
      %80 = vst.msk [vmem:[#allocation3] sm:$0xff] %vm79, 0.0
      %81 = vst.msk [vmem:[#allocation3 + $0x8] sm:$0xff] %vm79, 0.0
      %82 = vst.msk [vmem:[#allocation3 + $0x10] sm:$0xff] %vm79, 0.0
      %83 = vst.msk [vmem:[#allocation3 + $0x18] sm:$0xff] %vm79, 0.0
    $region37: #{tpu_custom_call.1} parent=1 // pred_fallthru
      _
    %v84 = vld [vmem:[#allocation4] sm:$0xff]
    %v85 = vunpack.c.0.s8 %v84
    %v86 = vunpack.c.1.s8 %v84
    %v87 = vunpack.c.2.s8 %v84
    %v88 = vunpack.c.3.s8 %v84
    %v89 = vcvt.s32.f32 %v85
    %v90 = vcvt.s32.f32 %v86
    %v91 = vcvt.s32.f32 %v87
    %v92 = vcvt.s32.f32 %v88
    %v93 = vld [vmem:[#allocation7] sm:$0xf]
    %v94 = vld [vmem:[#allocation7 + $0x4] sm:$0xf]
    %v95 = vld [vmem:[#allocation7 + $0x8] sm:$0xf]
    %v96 = vld [vmem:[#allocation7 + $0xc] sm:$0xf]
    %v97 = vunpack.c.l.bf16 %v93
    %v98 = vunpack.c.l.bf16 %v94
    %v99 = vunpack.c.l.bf16 %v95
    %v100 = vunpack.c.l.bf16 %v96
    %v101 = vmul.f32 %v89, %v97
    %v102 = vmul.f32 %v90, %v98
    %v103 = vmul.f32 %v91, %v99
    %v104 = vmul.f32 %v92, %v100
    %v105 = vld [vmem:[#allocation9] sm:$0xf]
    %v106 = vld [vmem:[#allocation9 + $0x4] sm:$0xf]
    %v107 = vld [vmem:[#allocation9 + $0x8] sm:$0xf]
    %v108 = vld [vmem:[#allocation9 + $0xc] sm:$0xf]
    %v109 = vunpack.c.l.bf16 %v105
    %v110 = vunpack.c.l.bf16 %v106
    %v111 = vunpack.c.l.bf16 %v107
    %v112 = vunpack.c.l.bf16 %v108
    %v113 = vmul.f32 %v101, %v109
    %v114 = vmul.f32 %v102, %v110
    %v115 = vmul.f32 %v103, %v111
    %v116 = vmul.f32 %v104, %v112
    %v117 = vld [vmem:[#allocation3] sm:$0xff]
    %v118 = vld [vmem:[#allocation3 + $0x8] sm:$0xff]
    %v119 = vld [vmem:[#allocation3 + $0x10] sm:$0xff]
    %v120 = vld [vmem:[#allocation3 + $0x18] sm:$0xff]
    %121 = vadd.xlane.f32.xlu0 %v89
    %v122 = vpop.xlane.xlu0 %121
    %123 = vadd.xlane.f32.xlu0 %v90
    %v124 = vpop.xlane.xlu0 %123
    %125 = vadd.xlane.f32.xlu0 %v91
    %v126 = vpop.xlane.xlu0 %125
    %127 = vadd.xlane.f32.xlu0 %v92
    %v128 = vpop.xlane.xlu0 %127
    %v129 = vadd.f32 %v117, %v122
    %v130 = vadd.f32 %v118, %v124
    %v131 = vadd.f32 %v119, %v126
    %v132 = vadd.f32 %v120, %v128
    %vm133 = vcmask 7168
    %134 = vst.msk [vmem:[#allocation3] sm:$0xff] %vm133, %v129
    %135 = vst.msk [vmem:[#allocation3 + $0x8] sm:$0xff] %vm133, %v130
    %136 = vst.msk [vmem:[#allocation3 + $0x10] sm:$0xff] %vm133, %v131
    %137 = vst.msk [vmem:[#allocation3 + $0x18] sm:$0xff] %vm133, %v132
    %v138 = vld [vmem:[#allocation2] sm:$0xff]
    %v139 = vld [vmem:[#allocation2 + $0x8] sm:$0xff]
    %v140 = vld [vmem:[#allocation2 + $0x10] sm:$0xff]
    %v141 = vld [vmem:[#allocation2 + $0x18] sm:$0xff]
    %v142 = vld [vmem:[#allocation10] sm:$0xff]
    %v143 = vld [vmem:[#allocation10 + $0x8] sm:$0xff]
    %v144 = vld [vmem:[#allocation10 + $0x10] sm:$0xff]
    %v145 = vld [vmem:[#allocation10 + $0x18] sm:$0xff]
    %v146 = vld [vmem:[#allocation10 + $0x20] sm:$0xff]
    %v147 = vld [vmem:[#allocation10 + $0x28] sm:$0xff]
    %v148 = vld [vmem:[#allocation10 + $0x30] sm:$0xff]
    %v149 = vld [vmem:[#allocation10 + $0x38] sm:$0xff]
    %v150 = vld [vmem:[#allocation10 + $0x40] sm:$0xff]
    %v151 = vld [vmem:[#allocation10 + $0x48] sm:$0xff]
    %v152 = vld [vmem:[#allocation10 + $0x50] sm:$0xff]
    %v153 = vld [vmem:[#allocation10 + $0x58] sm:$0xff]
    %v154 = vld [vmem:[#allocation10 + $0x60] sm:$0xff]
    %v155 = vld [vmem:[#allocation10 + $0x68] sm:$0xff]
    %v156 = vld [vmem:[#allocation10 + $0x70] sm:$0xff]
    %v157 = vld [vmem:[#allocation10 + $0x78] sm:$0xff]
    %158 = vmatprep.subr.mxu0 0.0
    %159 = vmatpush1.msra.mxu0 %v142
    %160 = vmatprep.subr.mxu0 0.0
    %161 = vmatpush1.msra.mxu0 %v143
    %162 = vmatprep.subr.mxu0 0.0
    %163 = vmatpush1.msra.mxu0 %v144
    %164 = vmatprep.subr.mxu0 0.0
    %165 = vmatpush1.msra.mxu0 %v145
    %166 = vmatprep.subr.mxu0 0.0
    %167 = vmatpush1.msra.mxu0 %v146
    %168 = vmatprep.subr.mxu0 0.0
    %169 = vmatpush1.msra.mxu0 %v147
    %170 = vmatprep.subr.mxu0 0.0
    %171 = vmatpush1.msra.mxu0 %v148
    %172 = vmatprep.subr.mxu0 0.0
    %173 = vmatpush1.msra.mxu0 %v149
    %174 = vmatprep.subr.mxu0 0.0
    %175 = vmatpush1.msra.mxu0 %v150
    %176 = vmatprep.subr.mxu0 0.0
    %177 = vmatpush1.msra.mxu0 %v151
    %178 = vmatprep.subr.mxu0 0.0
    %179 = vmatpush1.msra.mxu0 %v152
    %180 = vmatprep.subr.mxu0 0.0
    %181 = vmatpush1.msra.mxu0 %v153
    %182 = vmatprep.subr.mxu0 0.0
    %183 = vmatpush1.msra.mxu0 %v154
    %184 = vmatprep.subr.mxu0 0.0
    %185 = vmatpush1.msra.mxu0 %v155
    %186 = vmatprep.subr.mxu0 0.0
    %187 = vmatpush1.msra.mxu0 %v156
    %188 = vmatprep.subr.mxu0 0.0
    %189 = vmatpush1.msra.mxu0 %v157
    %190 = vmatprep.subr.mxu0 0.0
    %191 = vmatpush1.msra.mxu0 0.0
    %192 = vmatprep.subr.mxu0 0.0
    %193 = vmatpush1.msra.mxu0 0.0
    %194 = vmatprep.subr.mxu0 0.0
    %195 = vmatpush1.msra.mxu0 0.0
    %196 = vmatprep.subr.mxu0 0.0
    %197 = vmatpush1.msra.mxu0 0.0
    %198 = vmatprep.subr.mxu0 0.0
    %199 = vmatpush1.msra.mxu0 0.0
    %200 = vmatprep.subr.mxu0 0.0
    %201 = vmatpush1.msra.mxu0 0.0
    %202 = vmatprep.subr.mxu0 0.0
    %203 = vmatpush1.msra.mxu0 0.0
    %204 = vmatprep.subr.mxu0 0.0
    %205 = vmatpush1.msra.mxu0 0.0
    %206 = vmatprep.subr.mxu0 0.0
    %207 = vmatpush1.msra.mxu0 0.0
    %208 = vmatprep.subr.mxu0 0.0
    %209 = vmatpush1.msra.mxu0 0.0
    %210 = vmatprep.subr.mxu0 0.0
    %211 = vmatpush1.msra.mxu0 0.0
    %212 = vmatprep.subr.mxu0 0.0
    %213 = vmatpush1.msra.mxu0 0.0
    %214 = vmatprep.subr.mxu0 0.0
    %215 = vmatpush1.msra.mxu0 0.0
    %216 = vmatprep.subr.mxu0 0.0
    %217 = vmatpush1.msra.mxu0 0.0
    %218 = vmatprep.subr.mxu0 0.0
    %219 = vmatpush1.msra.mxu0 0.0
    %220 = vmatprep.subr.mxu0 0.0
    %221 = vmatpush1.msra.mxu0 0.0
    %222 = vmatprep.mubr.f32.mxu0 0.0
    %223 = vmatmul.mubr.f32.gmra.mrb[0].mxu0 %v113
    %v224 = vpop.f32.mrb[0].mxu0
    %v225 = vadd.f32 0.0, %v224
    %v226 = vpop.f32.mrb[0].mxu0
    %227 = vmatprep.mubr.f32.mxu0 0.0
    %228 = vmatmul.mubr.f32.gmra.mrb[0].mxu0 %v114
    %v229 = vpop.f32.mrb[0].mxu0
    %v230 = vadd.f32 0.0, %v229
    %v231 = vpop.f32.mrb[0].mxu0
    %232 = vmatprep.mubr.f32.mxu0 0.0
    %233 = vmatmul.mubr.f32.gmra.mrb[0].mxu0 %v115
    %v234 = vpop.f32.mrb[0].mxu0
    %v235 = vadd.f32 0.0, %v234
    %v236 = vpop.f32.mrb[0].mxu0
    %237 = vmatprep.mubr.f32.mxu0 0.0
    %238 = vmatmul.mubr.f32.gmra.mrb[0].mxu0 %v116
    %v239 = vpop.f32.mrb[0].mxu0
    %v240 = vadd.f32 0.0, %v239
    %v241 = vpop.f32.mrb[0].mxu0
    %242 = vdwg.mxu0
    %v243 = vadd.f32 %v138, %v225
    %v244 = vadd.f32 %v139, %v230
    %v245 = vadd.f32 %v140, %v235
    %v246 = vadd.f32 %v141, %v240
    %247 = vst [vmem:[#allocation2] sm:$0xff] %v243
    %248 = vst [vmem:[#allocation2 + $0x8] sm:$0xff] %v244
    %249 = vst [vmem:[#allocation2 + $0x10] sm:$0xff] %v245
    %250 = vst [vmem:[#allocation2 + $0x18] sm:$0xff] %v246
    // Predicated region
    $region38: #{tpu_custom_call.1} parent=1 // pred_check
      %p251 = pneg %p71
    $region39: #{tpu_custom_call.1} parent=1 // pred_check_branch
      %253 = sbr.rel (%p251) target = $region41
    $region40: #{tpu_custom_call.1} parent=1 // pred_region
      %v254 = vld [vmem:[#allocation3] sm:$0xff]
      %v255 = vld [vmem:[#allocation3 + $0x8] sm:$0xff]
      %v256 = vld [vmem:[#allocation3 + $0x10] sm:$0xff]
      %v257 = vld [vmem:[#allocation3 + $0x18] sm:$0xff]
      %v258 = vrcp.pop %v254
      %v259 = vmul.f32 1.0, %v258
      %v260 = vrcp.pop %v255
      %v261 = vmul.f32 1.0, %v260
      %v262 = vrcp.pop %v256
      %v263 = vmul.f32 1.0, %v262
      %v264 = vrcp.pop %v257
      %v265 = vmul.f32 1.0, %v264
      %v266 = vld [vmem:[#allocation2] sm:$0xff]
      %v267 = vld [vmem:[#allocation2 + $0x8] sm:$0xff]
      %v268 = vld [vmem:[#allocation2 + $0x10] sm:$0xff]
      %v269 = vld [vmem:[#allocation2 + $0x18] sm:$0xff]
      %271 = vset.pattern.permute.xlu0 0
      %272 = vperm.xlu0 %271, %v259
      %v273 = vpop.permute.xlu0 %272
      %276 = vset.pattern.permute.xlu0 0
      %277 = vperm.xlu0 %276, %v261
      %v278 = vpop.permute.xlu0 %277
      %281 = vset.pattern.permute.xlu0 0
      %282 = vperm.xlu0 %281, %v263
      %v283 = vpop.permute.xlu0 %282
      %286 = vset.pattern.permute.xlu0 0
      %287 = vperm.xlu0 %286, %v265
      %v288 = vpop.permute.xlu0 %287
      %v290 = vmul.f32 %v266, %v273
      %v291 = vmul.f32 %v267, %v278
      %v292 = vmul.f32 %v268, %v283
      %v293 = vmul.f32 %v269, %v288
      %v294 = vtanh.pop %v290
      %v295 = vtanh.pop %v291
      %v296 = vtanh.pop %v292
      %v297 = vtanh.pop %v293
      %298 = vst [vmem:[#allocation12] sm:$0xff] %v294
      %299 = vst [vmem:[#allocation12 + $0x8] sm:$0xff] %v295
      %300 = vst [vmem:[#allocation12 + $0x10] sm:$0xff] %v296
      %301 = vst [vmem:[#allocation12 + $0x18] sm:$0xff] %v297
    $region41: #{tpu_custom_call.1} parent=1 // pred_fallthru
      _
    // Predicated region
    $region42: #{tpu_custom_call.1} parent=1 // pred_check
      _
    $region43: #{tpu_custom_call.1} parent=1 // pred_check_branch
      %303 = sbr.rel (0) target = $region45
    $region44: #{tpu_custom_call.1} parent=1 // pred_region
      %s305 = ssub.s32 512, 512
      %306 = vsyncadd [#allocation6], %s305
      %s307 = sshll.u32 [#allocation12], 4
      %s308 = int_to_ptr.vmem [resolvable:$true] %s307
      %313 = dma.vmem_to_hbm [thread:$0]  %s308, 512, %s4, [#allocation6], 128, 128, 8
    $region45: #{tpu_custom_call.1} parent=1 // pred_fallthru
      _
    // Predicated region
    $region46: #{tpu_custom_call.1} parent=1 // pred_check
      _
    $region47: #{tpu_custom_call.1} parent=1 // pred_check_branch
      %315 = sbr.rel (0) target = $region49
    $region48: #{tpu_custom_call.1} parent=1 // pred_region
      %316 = dma.done [#allocation6], 512
    $region49: #{tpu_custom_call.1} parent=1 // pred_fallthru
      _
    %317 = vsyncpa [#allocation5], 1
    %318 = vsyncpa [#allocation8], 1
    %319 = vsyncpa [#allocation11], 1
    %320 = vsyncpa [#allocation6], 1

</llo_original>
